<compile_context>
chip_gen: v6e
topology: v6e:2x2x1
jax: 0.10.0
libtpu: 0.0.40
codegen_flags: <defaults>
</compile_context>

<pallas_src>
import functools

import numpy as np
import jax
import jax.numpy as jnp
from jax import lax
from jax.experimental import pallas as pl
from jax.experimental.pallas import tpu as pltpu


def _round_up(x, m):
    return ((x + m - 1) // m) * m


def _guess_tokens_kernel(graph_id_ref, vocab_idx_ref, out_ref, acc_ref, *,
                         num_vocab_padded, tg, max_seq_len, min_occ):
    """graph_id_ref: [1, TN] int32, vocab_idx_ref: [1, TN] int32,
       out_ref: [max_seq_len, TG, V_pad] int8, acc_ref: [TG, V_pad] f32 scratch."""
    V = num_vocab_padded
    TN = graph_id_ref.shape[1]
    ni = pl.program_id(1)

    # ---- histogram accumulation over node tiles (reduction axis = grid axis 1) ----
    @pl.when(ni == 0)
    def _():
        acc_ref[...] = jnp.zeros_like(acc_ref)

    gid = graph_id_ref[...]                                   # [1, TN] lane-dense
    vid = vocab_idx_ref[...]                                  # [1, TN] lane-dense
    g_base = pl.program_id(0) * tg

    g_iota = lax.broadcasted_iota(jnp.int32, (tg, TN), 0) + g_base
    v_iota = lax.broadcasted_iota(jnp.int32, (V, TN), 0)
    # bf16 one-hots (exact 0/1), f32 MXU accumulation -> exact integer counts.
    A = (gid == g_iota).astype(jnp.bfloat16)                  # [TG, TN] graph membership
    Bt = (vid == v_iota).astype(jnp.bfloat16)                 # [V,  TN] vocab one-hot (transposed)

    # counts[g, v] += sum_n A[g, n] * Bt[v, n]   (contract shared lane-dense N dim)
    acc_ref[...] += lax.dot_general(
        A, Bt, dimension_numbers=(((1,), (1,)), ((), ())),
        preferred_element_type=jnp.float32)                   # [TG, V]

    # ---- argmax rounds only once, on the last node tile ----
    @pl.when(ni == pl.num_programs(1) - 1)
    def _():
        counts0 = acc_ref[...].astype(jnp.int32)              # exact integer counts
        col = lax.broadcasted_iota(jnp.int32, (tg, V), 1)
        rev = (V - 1) - col                                   # tie-break: lowest col wins

        def body(j, counts):
            # Single fused cross-lane reduction: key encodes (count, -col).
            key = counts * V + rev
            kmax = jnp.max(key, axis=-1, keepdims=True)       # [TG, 1]
            hit = key == kmax                                 # exactly one True per row
            mark = hit & (counts >= min_occ)
            out_ref[j] = jnp.where(mark, 1, -1).astype(jnp.int8)
            return jnp.where(hit, 0, counts)                  # z[tokidx] = 0 (always)

        lax.fori_loop(0, max_seq_len, body, counts0, unroll=True)


def guess_tokens_pallas(graph_id, vocab_idx, *, num_graphs, num_vocab,
                        max_seq_len, min_occ, node_tile=128):
    """graph_id, vocab_idx: [N] int32.  Returns int8 [max_seq_len, num_graphs, num_vocab]."""
    N = int(graph_id.shape[0])

    # Padded, hardware-friendly extents: vocab multiple of 128 (lane-dense stores),
    # graphs multiple of 8 (sublane), nodes multiple of the node tile.
    V_pad = _round_up(max(num_vocab, 1), 128)
    G8 = _round_up(max(num_graphs, 1), 8)
    TG = G8 if G8 <= 32 else 32                                # int8 out tile: ==full or mult of 32
    G_pad = _round_up(max(num_graphs, 1), TG)
    TN = node_tile
    N_pad = _round_up(max(N, 1), TN)

    gid32 = graph_id.astype(jnp.int32)
    vid32 = vocab_idx.astype(jnp.int32)
    # Unmapped sentinel must land outside the *padded* vocab width.
    vid32 = jnp.where(vid32 >= num_vocab, V_pad, vid32)
    # Pad node streams with sentinels that drop out of both one-hots.
    gid_p = jnp.full((N_pad,), G_pad, jnp.int32).at[:N].set(gid32)
    vid_p = jnp.full((N_pad,), V_pad, jnp.int32).at[:N].set(vid32)

    kernel = functools.partial(
        _guess_tokens_kernel,
        num_vocab_padded=V_pad, tg=TG,
        max_seq_len=max_seq_len, min_occ=min_occ)

    grid = (G_pad // TG, N_pad // TN)                          # (graph blocks, node tiles)
    out = pl.pallas_call(
        kernel,
        out_shape=jax.ShapeDtypeStruct((max_seq_len, G_pad, V_pad), jnp.int8),
        grid=grid,
        in_specs=[
            pl.BlockSpec((1, TN), lambda gi, ni: (0, ni)),     # graph ids, lane-dense
            pl.BlockSpec((1, TN), lambda gi, ni: (0, ni)),     # vocab ids, lane-dense
        ],
        out_specs=pl.BlockSpec((max_seq_len, TG, V_pad),
                               lambda gi, ni: (0, gi, 0)),     # resident across node axis
        scratch_shapes=[pltpu.VMEM((TG, V_pad), jnp.float32)], # counts accumulator
        compiler_params=pltpu.CompilerParams(
            dimension_semantics=("parallel", "arbitrary")),
    )(gid_p.reshape(1, N_pad), vid_p.reshape(1, N_pad))

    return out[:, :num_graphs, :num_vocab]


def model_forward(x, node_depth, attr2vocab, *, num_graphs, num_vocab,
                  max_seq_len, min_occ):
    """Glue (index bookkeeping + gather) in plain JAX, hot path in Pallas."""
    # node_depth == 0 marks each graph's root; cumulative count gives graph id per node.
    graph_id = jnp.cumsum((node_depth == 0).astype(jnp.int32)) - 1          # [N]
    # attr idx -> vocab idx (>= num_vocab means "not in vocab", dropped by histogram).
    vocab_idx = attr2vocab[x[:, 1]]                                         # [N]
    preds = guess_tokens_pallas(graph_id, vocab_idx,
                                num_graphs=num_graphs, num_vocab=num_vocab,
                                max_seq_len=max_seq_len, min_occ=min_occ)
    # Kernel writes int8 (+1/-1); cast at the boundary (PyTorch would give int64).
    preds = preds.astype(jnp.int32)
    return [preds[j] for j in range(max_seq_len)]                           # pred_list


def reference_numpy(x, node_depth, attr2vocab, num_graphs, num_vocab,
                    max_seq_len, min_occ):
    x = np.asarray(x); nd = np.asarray(node_depth); tbl = np.asarray(attr2vocab)
    gid = np.cumsum(nd == 0) - 1
    vid = tbl[x[:, 1]]
    preds = [np.full((num_graphs, num_vocab), -1, np.int32) for _ in range(max_seq_len)]
    for g in range(num_graphs):
        z = np.zeros(num_vocab + 1, np.int64)
        for v in vid[gid == g]:
            z[min(int(v), num_vocab)] += 1
        z = z[:num_vocab]
        for j in range(max_seq_len):
            tok = int(np.argmax(z))
            if z[tok] >= min_occ:
                preds[j][g, tok] = 1
            z[tok] = 0
    return preds


if __name__ == "__main__":
    # Small shapes consistent with the module's forward.
    N = 320           # total nodes in the batch (=> 3 node tiles of 128 after padding)
    G = 8             # num_graphs (40 nodes per graph)
    NUM_ATTR = 8      # distinct node-attribute ids
    NUM_VOCAB = 200   # vocab size (not a multiple of 128 -> exercises padding path)
    MAX_SEQ_LEN = 5
    MIN_OCC = 2

    key = jax.random.PRNGKey(0)
    k_attr, = jax.random.split(key, 1)

    # x: [N, 2] int32; only column 1 (attr idx) is used by the forward pass.
    attr_col = jax.random.randint(k_attr, (N,), 0, NUM_ATTR, dtype=jnp.int32)
    x = jnp.stack([jnp.zeros((N,), jnp.int32), attr_col], axis=1)            # [N, 2]

    # node_depth: 0 at each graph root (every 40th node), >0 elsewhere.
    node_depth = jnp.where(jnp.arange(N) % (N // G) == 0, 0, 1).astype(jnp.int32)

    # Deterministic attridx2vocabidx table (synthetic stand-in for the mapping dict):
    # attr i -> vocab (i * 13), except attr 3 which is not in the vocab (-> NUM_VOCAB).
    vals = (np.arange(NUM_ATTR) * 13).astype(np.int32)
    vals[3] = NUM_VOCAB            # unmapped attribute
    attr2vocab = jnp.asarray(vals, dtype=jnp.int32)                           # [NUM_ATTR]

    pred_list = model_forward(x, node_depth, attr2vocab,
                              num_graphs=G, num_vocab=NUM_VOCAB,
                              max_seq_len=MAX_SEQ_LEN, min_occ=MIN_OCC)
    pred_list = [jax.block_until_ready(p) for p in pred_list]

    ref_list = reference_numpy(x, node_depth, attr2vocab,
                               G, NUM_VOCAB, MAX_SEQ_LEN, MIN_OCC)
    for got, want in zip(pred_list, ref_list):
        np.testing.assert_array_equal(np.asarray(got), want)

    print("KERNEL_OK")
</pallas_src>

<mosaic_0001>
module attributes {stable_mosaic.version = 11 : i64} {
  func.func @_guess_tokens_kernel(%arg0: i32, %arg1: i32, %arg2: memref<1x128xi32, #tpu.memory_space<vmem>>, %arg3: memref<1x128xi32, #tpu.memory_space<vmem>>, %arg4: memref<5x8x256xi8, #tpu.memory_space<vmem>>, %arg5: memref<8x256xf32, #tpu.memory_space<vmem>>) attributes {dimension_semantics = [#tpu.dimension_semantics<parallel>, #tpu.dimension_semantics<arbitrary>], iteration_bounds = array<i64: 1, 3>, scalar_prefetch = 0 : i64, scratch_operands = 1 : i64, tpu.core_type = #tpu.core_type<tc>, window_params = [{transform_indices = @transform_0, window_bounds = array<i64: 1, 128>}, {transform_indices = @transform_1, window_bounds = array<i64: 1, 128>}, {transform_indices = @transform_2, window_bounds = array<i64: 5, 8, 256>}]} {
    %c0_i32 = arith.constant 0 : i32
    %0 = arith.cmpi eq, %arg1, %c0_i32 : i32
    %1 = arith.extui %0 : i1 to i32
    %c0_i32_0 = arith.constant 0 : i32
    %2 = arith.cmpi ne, %1, %c0_i32_0 : i32
    scf.if %2 {
      %cst_9 = arith.constant 0.000000e+00 : f32
      %27 = vector.broadcast %cst_9 : f32 to vector<8x256xf32>
      %c0_10 = arith.constant 0 : index
      %c0_11 = arith.constant 0 : index
      %28 = vector.load %arg5[%c0_10, %c0_11] : memref<8x256xf32, #tpu.memory_space<vmem>>, vector<8x256xf32>
      tpu.vector_store %arg5[%c0_10, %c0_11], %27 {strides = array<i32>} : memref<8x256xf32, #tpu.memory_space<vmem>>, vector<8x256xf32>,
    } else {
    }
    %c0 = arith.constant 0 : index
    %c0_1 = arith.constant 0 : index
    %3 = vector.load %arg2[%c0, %c0_1] : memref<1x128xi32, #tpu.memory_space<vmem>>, vector<1x128xi32>
    %c0_2 = arith.constant 0 : index
    %c0_3 = arith.constant 0 : index
    %4 = vector.load %arg3[%c0_2, %c0_3] : memref<1x128xi32, #tpu.memory_space<vmem>>, vector<1x128xi32>
    %c8_i32 = arith.constant 8 : i32
    %5 = arith.muli %arg0, %c8_i32 : i32
    %6 = tpu.iota {dimensions = array<i32: 0>} : vector<8x128xi32>
    %7 = vector.broadcast %5 : i32 to vector<8x128xi32>
    %8 = arith.addi %6, %7 : vector<8x128xi32>
    %9 = tpu.iota {dimensions = array<i32: 0>} : vector<256x128xi32>
    %10 = vector.broadcast %3 : vector<1x128xi32> to vector<8x128xi32>
    %11 = arith.cmpi eq, %10, %8 : vector<8x128xi32>
    %12 = arith.extui %11 : vector<8x128xi1> to vector<8x128xi32>
    %13 = arith.sitofp %12 : vector<8x128xi32> to vector<8x128xf32>
    %14 = arith.truncf %13 : vector<8x128xf32> to vector<8x128xbf16>
    %15 = vector.broadcast %4 : vector<1x128xi32> to vector<256x128xi32>
    %16 = arith.cmpi eq, %15, %9 : vector<256x128xi32>
    %17 = arith.extui %16 : vector<256x128xi1> to vector<256x128xi32>
    %18 = arith.sitofp %17 : vector<256x128xi32> to vector<256x128xf32>
    %19 = arith.truncf %18 : vector<256x128xf32> to vector<256x128xbf16>
    %c0_4 = arith.constant 0 : index
    %c0_5 = arith.constant 0 : index
    %20 = vector.load %arg5[%c0_4, %c0_5] : memref<8x256xf32, #tpu.memory_space<vmem>>, vector<8x256xf32>
    %cst = arith.constant dense<0.000000e+00> : vector<8x256xf32>
    %21 = tpu.matmul %14, %19, %cst {dimension_numbers = #tpu.dot_dimension_numbers<[1], [1], [0], [0], [0, 0, 1, 0], [], []>} : vector<8x128xbf16>, vector<256x128xbf16>, vector<8x256xf32> -> vector<8x256xf32>
    %22 = arith.addf %20, %21 : vector<8x256xf32>
    %c0_6 = arith.constant 0 : index
    %c0_7 = arith.constant 0 : index
    %23 = vector.load %arg5[%c0_6, %c0_7] : memref<8x256xf32, #tpu.memory_space<vmem>>, vector<8x256xf32>
    tpu.vector_store %arg5[%c0_6, %c0_7], %22 {strides = array<i32>} : memref<8x256xf32, #tpu.memory_space<vmem>>, vector<8x256xf32>,
    %c2_i32 = arith.constant 2 : i32
    %24 = arith.cmpi eq, %arg1, %c2_i32 : i32
    %25 = arith.extui %24 : i1 to i32
    %c0_i32_8 = arith.constant 0 : i32
    %26 = arith.cmpi ne, %25, %c0_i32_8 : i32
    scf.if %26 {
      %c0_9 = arith.constant 0 : index
      %c0_10 = arith.constant 0 : index
      %27 = vector.load %arg5[%c0_9, %c0_10] : memref<8x256xf32, #tpu.memory_space<vmem>>, vector<8x256xf32>
      %28 = arith.fptosi %27 : vector<8x256xf32> to vector<8x256xi32>
      %29 = tpu.iota {dimensions = array<i32: 1>} : vector<8x256xi32>
      %c255_i32 = arith.constant 255 : i32
      %30 = vector.broadcast %c255_i32 : i32 to vector<8x256xi32>
      %31 = arith.subi %30, %29 : vector<8x256xi32>
      %c0_i32_11 = arith.constant 0 : i32
      %c256_i32 = arith.constant 256 : i32
      %32 = vector.broadcast %c256_i32 : i32 to vector<8x256xi32>
      %33 = arith.muli %28, %32 : vector<8x256xi32>
      %34 = arith.addi %33, %31 : vector<8x256xi32>
      %cst_12 = arith.constant dense<-2147483648> : vector<8xi32>
      %35 = vector.multi_reduction <maxsi>, %34, %cst_12 [1] : vector<8x256xi32> to vector<8xi32>
      %36 = vector.shape_cast %35 : vector<8xi32> to vector<8x1xi32>
      %37 = vector.broadcast %36 : vector<8x1xi32> to vector<8x256xi32>
      %38 = arith.cmpi eq, %34, %37 : vector<8x256xi32>
      %c2_i32_13 = arith.constant 2 : i32
      %39 = vector.broadcast %c2_i32_13 : i32 to vector<8x256xi32>
      %40 = arith.cmpi sge, %28, %39 : vector<8x256xi32>
      %41 = arith.andi %38, %40 : vector<8x256xi1>
      %c1_i32 = arith.constant 1 : i32
      %c-1_i32 = arith.constant -1 : i32
      %42 = vector.broadcast %c1_i32 : i32 to vector<8x256xi32>
      %43 = vector.broadcast %c-1_i32 : i32 to vector<8x256xi32>
      %44 = arith.select %41, %42, %43 : vector<8x256xi1>, vector<8x256xi32>
      %45 = arith.trunci %44 : vector<8x256xi32> to vector<8x256xi8>
      %46 = arith.index_cast %c0_i32_11 : i32 to index
      %c0_14 = arith.constant 0 : index
      %c0_15 = arith.constant 0 : index
      %47 = vector.load %arg4[%46, %c0_14, %c0_15] : memref<5x8x256xi8, #tpu.memory_space<vmem>>, vector<1x8x256xi8>
      %48 = vector.shape_cast %47 : vector<1x8x256xi8> to vector<8x256xi8>
      %49 = vector.shape_cast %45 : vector<8x256xi8> to vector<1x8x256xi8>
      tpu.vector_store %arg4[%46, %c0_14, %c0_15], %49 {strides = array<i32>} : memref<5x8x256xi8, #tpu.memory_space<vmem>>, vector<1x8x256xi8>,
      %c0_i32_16 = arith.constant 0 : i32
      %50 = vector.broadcast %c0_i32_16 : i32 to vector<8x256xi32>
      %51 = arith.select %38, %50, %28 : vector<8x256xi1>, vector<8x256xi32>
      %c1_i32_17 = arith.constant 1 : i32
      %c256_i32_18 = arith.constant 256 : i32
      %52 = vector.broadcast %c256_i32_18 : i32 to vector<8x256xi32>
      %53 = arith.muli %51, %52 : vector<8x256xi32>
      %54 = arith.addi %53, %31 : vector<8x256xi32>
      %cst_19 = arith.constant dense<-2147483648> : vector<8xi32>
      %55 = vector.multi_reduction <maxsi>, %54, %cst_19 [1] : vector<8x256xi32> to vector<8xi32>
      %56 = vector.shape_cast %55 : vector<8xi32> to vector<8x1xi32>
      %57 = vector.broadcast %56 : vector<8x1xi32> to vector<8x256xi32>
      %58 = arith.cmpi eq, %54, %57 : vector<8x256xi32>
      %c2_i32_20 = arith.constant 2 : i32
      %59 = vector.broadcast %c2_i32_20 : i32 to vector<8x256xi32>
      %60 = arith.cmpi sge, %51, %59 : vector<8x256xi32>
      %61 = arith.andi %58, %60 : vector<8x256xi1>
      %c1_i32_21 = arith.constant 1 : i32
      %c-1_i32_22 = arith.constant -1 : i32
      %62 = vector.broadcast %c1_i32_21 : i32 to vector<8x256xi32>
      %63 = vector.broadcast %c-1_i32_22 : i32 to vector<8x256xi32>
      %64 = arith.select %61, %62, %63 : vector<8x256xi1>, vector<8x256xi32>
      %65 = arith.trunci %64 : vector<8x256xi32> to vector<8x256xi8>
      %66 = arith.index_cast %c1_i32_17 : i32 to index
      %c0_23 = arith.constant 0 : index
      %c0_24 = arith.constant 0 : index
      %67 = vector.load %arg4[%66, %c0_23, %c0_24] : memref<5x8x256xi8, #tpu.memory_space<vmem>>, vector<1x8x256xi8>
      %68 = vector.shape_cast %67 : vector<1x8x256xi8> to vector<8x256xi8>
      %69 = vector.shape_cast %65 : vector<8x256xi8> to vector<1x8x256xi8>
      tpu.vector_store %arg4[%66, %c0_23, %c0_24], %69 {strides = array<i32>} : memref<5x8x256xi8, #tpu.memory_space<vmem>>, vector<1x8x256xi8>,
      %c0_i32_25 = arith.constant 0 : i32
      %70 = vector.broadcast %c0_i32_25 : i32 to vector<8x256xi32>
      %71 = arith.select %58, %70, %51 : vector<8x256xi1>, vector<8x256xi32>
      %c2_i32_26 = arith.constant 2 : i32
      %c256_i32_27 = arith.constant 256 : i32
      %72 = vector.broadcast %c256_i32_27 : i32 to vector<8x256xi32>
      %73 = arith.muli %71, %72 : vector<8x256xi32>
      %74 = arith.addi %73, %31 : vector<8x256xi32>
      %cst_28 = arith.constant dense<-2147483648> : vector<8xi32>
      %75 = vector.multi_reduction <maxsi>, %74, %cst_28 [1] : vector<8x256xi32> to vector<8xi32>
      %76 = vector.shape_cast %75 : vector<8xi32> to vector<8x1xi32>
      %77 = vector.broadcast %76 : vector<8x1xi32> to vector<8x256xi32>
      %78 = arith.cmpi eq, %74, %77 : vector<8x256xi32>
      %c2_i32_29 = arith.constant 2 : i32
      %79 = vector.broadcast %c2_i32_29 : i32 to vector<8x256xi32>
      %80 = arith.cmpi sge, %71, %79 : vector<8x256xi32>
      %81 = arith.andi %78, %80 : vector<8x256xi1>
      %c1_i32_30 = arith.constant 1 : i32
      %c-1_i32_31 = arith.constant -1 : i32
      %82 = vector.broadcast %c1_i32_30 : i32 to vector<8x256xi32>
      %83 = vector.broadcast %c-1_i32_31 : i32 to vector<8x256xi32>
      %84 = arith.select %81, %82, %83 : vector<8x256xi1>, vector<8x256xi32>
      %85 = arith.trunci %84 : vector<8x256xi32> to vector<8x256xi8>
      %86 = arith.index_cast %c2_i32_26 : i32 to index
      %c0_32 = arith.constant 0 : index
      %c0_33 = arith.constant 0 : index
      %87 = vector.load %arg4[%86, %c0_32, %c0_33] : memref<5x8x256xi8, #tpu.memory_space<vmem>>, vector<1x8x256xi8>
      %88 = vector.shape_cast %87 : vector<1x8x256xi8> to vector<8x256xi8>
      %89 = vector.shape_cast %85 : vector<8x256xi8> to vector<1x8x256xi8>
      tpu.vector_store %arg4[%86, %c0_32, %c0_33], %89 {strides = array<i32>} : memref<5x8x256xi8, #tpu.memory_space<vmem>>, vector<1x8x256xi8>,
      %c0_i32_34 = arith.constant 0 : i32
      %90 = vector.broadcast %c0_i32_34 : i32 to vector<8x256xi32>
      %91 = arith.select %78, %90, %71 : vector<8x256xi1>, vector<8x256xi32>
      %c3_i32 = arith.constant 3 : i32
      %c256_i32_35 = arith.constant 256 : i32
      %92 = vector.broadcast %c256_i32_35 : i32 to vector<8x256xi32>
      %93 = arith.muli %91, %92 : vector<8x256xi32>
      %94 = arith.addi %93, %31 : vector<8x256xi32>
      %cst_36 = arith.constant dense<-2147483648> : vector<8xi32>
      %95 = vector.multi_reduction <maxsi>, %94, %cst_36 [1] : vector<8x256xi32> to vector<8xi32>
      %96 = vector.shape_cast %95 : vector<8xi32> to vector<8x1xi32>
      %97 = vector.broadcast %96 : vector<8x1xi32> to vector<8x256xi32>
      %98 = arith.cmpi eq, %94, %97 : vector<8x256xi32>
      %c2_i32_37 = arith.constant 2 : i32
      %99 = vector.broadcast %c2_i32_37 : i32 to vector<8x256xi32>
      %100 = arith.cmpi sge, %91, %99 : vector<8x256xi32>
      %101 = arith.andi %98, %100 : vector<8x256xi1>
      %c1_i32_38 = arith.constant 1 : i32
      %c-1_i32_39 = arith.constant -1 : i32
      %102 = vector.broadcast %c1_i32_38 : i32 to vector<8x256xi32>
      %103 = vector.broadcast %c-1_i32_39 : i32 to vector<8x256xi32>
      %104 = arith.select %101, %102, %103 : vector<8x256xi1>, vector<8x256xi32>
      %105 = arith.trunci %104 : vector<8x256xi32> to vector<8x256xi8>
      %106 = arith.index_cast %c3_i32 : i32 to index
      %c0_40 = arith.constant 0 : index
      %c0_41 = arith.constant 0 : index
      %107 = vector.load %arg4[%106, %c0_40, %c0_41] : memref<5x8x256xi8, #tpu.memory_space<vmem>>, vector<1x8x256xi8>
      %108 = vector.shape_cast %107 : vector<1x8x256xi8> to vector<8x256xi8>
      %109 = vector.shape_cast %105 : vector<8x256xi8> to vector<1x8x256xi8>
      tpu.vector_store %arg4[%106, %c0_40, %c0_41], %109 {strides = array<i32>} : memref<5x8x256xi8, #tpu.memory_space<vmem>>, vector<1x8x256xi8>,
      %c0_i32_42 = arith.constant 0 : i32
      %110 = vector.broadcast %c0_i32_42 : i32 to vector<8x256xi32>
      %111 = arith.select %98, %110, %91 : vector<8x256xi1>, vector<8x256xi32>
      %c4_i32 = arith.constant 4 : i32
      %c256_i32_43 = arith.constant 256 : i32
      %112 = vector.broadcast %c256_i32_43 : i32 to vector<8x256xi32>
      %113 = arith.muli %111, %112 : vector<8x256xi32>
      %114 = arith.addi %113, %31 : vector<8x256xi32>
      %cst_44 = arith.constant dense<-2147483648> : vector<8xi32>
      %115 = vector.multi_reduction <maxsi>, %114, %cst_44 [1] : vector<8x256xi32> to vector<8xi32>
      %116 = vector.shape_cast %115 : vector<8xi32> to vector<8x1xi32>
      %117 = vector.broadcast %116 : vector<8x1xi32> to vector<8x256xi32>
      %118 = arith.cmpi eq, %114, %117 : vector<8x256xi32>
      %c2_i32_45 = arith.constant 2 : i32
      %119 = vector.broadcast %c2_i32_45 : i32 to vector<8x256xi32>
      %120 = arith.cmpi sge, %111, %119 : vector<8x256xi32>
      %121 = arith.andi %118, %120 : vector<8x256xi1>
      %c1_i32_46 = arith.constant 1 : i32
      %c-1_i32_47 = arith.constant -1 : i32
      %122 = vector.broadcast %c1_i32_46 : i32 to vector<8x256xi32>
      %123 = vector.broadcast %c-1_i32_47 : i32 to vector<8x256xi32>
      %124 = arith.select %121, %122, %123 : vector<8x256xi1>, vector<8x256xi32>
      %125 = arith.trunci %124 : vector<8x256xi32> to vector<8x256xi8>
      %126 = arith.index_cast %c4_i32 : i32 to index
      %c0_48 = arith.constant 0 : index
      %c0_49 = arith.constant 0 : index
      %127 = vector.load %arg4[%126, %c0_48, %c0_49] : memref<5x8x256xi8, #tpu.memory_space<vmem>>, vector<1x8x256xi8>
      %128 = vector.shape_cast %127 : vector<1x8x256xi8> to vector<8x256xi8>
      %129 = vector.shape_cast %125 : vector<8x256xi8> to vector<1x8x256xi8>
      tpu.vector_store %arg4[%126, %c0_48, %c0_49], %129 {strides = array<i32>} : memref<5x8x256xi8, #tpu.memory_space<vmem>>, vector<1x8x256xi8>,
      %c0_i32_50 = arith.constant 0 : i32
      %130 = vector.broadcast %c0_i32_50 : i32 to vector<8x256xi32>
      %131 = arith.select %118, %130, %111 : vector<8x256xi1>, vector<8x256xi32>
      %c5_i32 = arith.constant 5 : i32
    } else {
    }
    return
  }
  func.func @transform_0(%arg0: i32, %arg1: i32) -> (i32, i32) {
    %c0_i32 = arith.constant 0 : i32
    %c0_i32_0 = arith.constant 0 : i32
    return %c0_i32, %arg1 : i32, i32
  }
  func.func @transform_1(%arg0: i32, %arg1: i32) -> (i32, i32) {
    %c0_i32 = arith.constant 0 : i32
    %c0_i32_0 = arith.constant 0 : i32
    return %c0_i32, %arg1 : i32, i32
  }
  func.func @transform_2(%arg0: i32, %arg1: i32) -> (i32, i32, i32) {
    %c0_i32 = arith.constant 0 : i32
    %c0_i32_0 = arith.constant 0 : i32
    %c0_i32_1 = arith.constant 0 : i32
    return %c0_i32, %arg0, %c0_i32_0 : i32, i32, i32
  }
}

</mosaic_0001>

<llo_original>
// kernel: tpu_custom_call.1
$region0: #{tpu_custom_call.1}
  #allocation0 [shape = 'u32[]', space=smem, size = 0x4, offset = 0x4, fixed_abs, tag = 'smem constant byte address 0x4 - core index']
  #allocation1 [shape = 'u32[144,128]{1,0:T(1,128)}', space=vmem, size = 0x12000, scoped, tag = 'internal scratch']
  #allocation2 [shape = 'f32[8,256]{1,0:T(8,128)}', space=vmem, size = 0x2000, scoped, tag = 'scratch operand']
  %s0 = inlined_call_operand.hbm [shape: s32[1,384], index: 0, kind: input, shape index: {}]
  %s1 = inlined_call_operand.hbm [shape: s32[1,384], index: 1, kind: input, shape index: {}]
  %s2 = inlined_call_operand.hbm [shape: s8[5,8,256], index: 2, kind: output, shape index: {}]
  %s3 = sld [smem:[#allocation0]]
  $region57: #{tpu_custom_call.1} parent=0
    _
  %s5 = ssub.s32 1, %s3
  %s6 = scalar_select 0, %s5, %s3
  $region1: #{tpu_custom_call.1} parent=0
    #allocation3 [shape = 'u8[1024]{0}', space=vmem, size = 0x400, scoped, tag = 'input window, operand 0']
    #allocation4 [shape = 's32[2]{0}', space=sflag, size = 0x8, scoped, tag = 'scoped memory for tpu_custom_call.1']
    #allocation5 [shape = 's32[2]{0}', space=sflag, size = 0x8, scoped, tag = 'scoped memory for tpu_custom_call.1']
    #allocation6 [shape = 'u8[1024]{0}', space=vmem, size = 0x400, scoped, tag = 'input window, operand 1']
    #allocation7 [shape = 's32[2]{0}', space=sflag, size = 0x8, scoped, tag = 'scoped memory for tpu_custom_call.1']
    #allocation8 [shape = 'u8[10240]{0}', space=vmem, size = 0x2800, scoped, tag = 'output window, operand 0, single buffered']
    %7 = vsyncpa [#allocation4], 0
    %s8 = scalar_lea.sflag [#allocation4], 1
    %9 = vsyncpa %s8, 0
    %10 = vsyncpa [#allocation7], 0
    %s11 = scalar_lea.sflag [#allocation7], 1
    %12 = vsyncpa %s11, 0
    %13 = vsyncpa [#allocation5], 0
    loop: start=0, step=1, limit=5
    $region2: #{tpu_custom_call.1} parent=1 // loop_pre_header
      _
    $region3: #{tpu_custom_call.1} parent=1 // loop_header
      %s15 = sphi 0, %s19
      %p16 = scmp.ge.s32.totalorder %s15, 5
      %s22 = sphi 0, %s34
      %s23 = sphi 0, %s30
      %s24 = sphi 0, %s22
      %s25 = sphi 0, %s23
      %s26 = sphi 0, %s24
      %s27 = sphi 0, %s25
      %s37 = sphi 0, %s39
      %s40 = sphi 0, %s37
      %s41 = sphi 0, %s40
      %s57 = sphi 0, %s41
      %s63 = sphi 0, %s65
      %s66 = sphi 0, %s63
      %s67 = sphi 0, %s66
      %s83 = sphi 0, %s67
      %s89 = sphi 0, %s91
      %s92 = sphi 0, %s89
      %s93 = sphi 0, %s92
      %s109 = sphi 0, %s93
    $region4: #{tpu_custom_call.1} parent=1 // loop_header_branch
      %18 = sbr.rel (%p16) target = $region8
    $region5: #{tpu_custom_call.1} parent=1 // loop_body
      %s20 = ssub.s32 %s15, 1
      %s21 = ssub.s32 %s15, 2
      %s28 = sadd.s32 1, %s23
      %p29 = scmp.ge.s32.totalorder %s28, 3
      %s30 = scalar_select %p29, 0, %s28
      %s31 = sadd.s32 1, %s22
      %s32 = scalar_select %p29, %s31, %s22
      %p33 = scmp.ge.s32.totalorder %s32, 1
      %s34 = scalar_select %p33, 0, %s32
      %s35 = ssub.s32 %s23, %s30
      %p36 = scmp.eq.s32.totalorder %s35, 0
      %s38 = sadd.s32 %s37, 1
      %s39 = scalar_select %p36, %s37, %s38
      %p42 = pneg %p36
      %p43 = scmp.eq.s32.totalorder %s15, 2
      %p44 = por %p42, %p43
      %p45 = scmp.ne.s32.totalorder %s37, %s40
      %p46 = scmp.eq.s32.totalorder %s15, 0
      %p47 = por %p45, %p46
      %p48 = scmp.ne.s32.totalorder %s37, %s40
      %p49 = scmp.eq.s32.totalorder %s20, 2
      %p50 = por %p48, %p49
      %p51 = scmp.ne.s32.totalorder %s40, %s41
      %p52 = scmp.eq.s32.totalorder %s20, 0
      %p53 = por %p51, %p52
      %p54 = scmp.ne.s32.totalorder %s40, %s41
      %p55 = scmp.eq.s32.totalorder %s21, 2
      %p56 = por %p54, %p55
      %p58 = scmp.ne.s32.totalorder %s41, %s57
      %p59 = scmp.eq.s32.totalorder %s21, 0
      %p60 = por %p58, %p59
      %s61 = ssub.s32 %s23, %s30
      %p62 = scmp.eq.s32.totalorder %s61, 0
      %s64 = sadd.s32 %s63, 1
      %s65 = scalar_select %p62, %s63, %s64
      %p68 = pneg %p62
      %p69 = scmp.eq.s32.totalorder %s15, 2
      %p70 = por %p68, %p69
      %p71 = scmp.ne.s32.totalorder %s63, %s66
      %p72 = scmp.eq.s32.totalorder %s15, 0
      %p73 = por %p71, %p72
      %p74 = scmp.ne.s32.totalorder %s63, %s66
      %p75 = scmp.eq.s32.totalorder %s20, 2
      %p76 = por %p74, %p75
      %p77 = scmp.ne.s32.totalorder %s66, %s67
      %p78 = scmp.eq.s32.totalorder %s20, 0
      %p79 = por %p77, %p78
      %p80 = scmp.ne.s32.totalorder %s66, %s67
      %p81 = scmp.eq.s32.totalorder %s21, 2
      %p82 = por %p80, %p81
      %p84 = scmp.ne.s32.totalorder %s67, %s83
      %p85 = scmp.eq.s32.totalorder %s21, 0
      %p86 = por %p84, %p85
      %s87 = ssub.s32 %s22, %s34
      %p88 = scmp.eq.s32.totalorder %s87, 0
      %s90 = sadd.s32 %s89, 1
      %s91 = scalar_select %p88, %s89, %s90
      %p94 = pneg %p88
      %p95 = scmp.eq.s32.totalorder %s15, 2
      %p96 = por %p94, %p95
      %p97 = scmp.ne.s32.totalorder %s89, %s92
      %p98 = scmp.eq.s32.totalorder %s15, 0
      %p99 = por %p97, %p98
      %p100 = scmp.ne.s32.totalorder %s89, %s92
      %p101 = scmp.eq.s32.totalorder %s20, 2
      %p102 = por %p100, %p101
      %p103 = scmp.ne.s32.totalorder %s92, %s93
      %p104 = scmp.eq.s32.totalorder %s20, 0
      %p105 = por %p103, %p104
      %p106 = scmp.ne.s32.totalorder %s92, %s93
      %p107 = scmp.eq.s32.totalorder %s21, 2
      %p108 = por %p106, %p107
      %p110 = scmp.ne.s32.totalorder %s93, %s109
      %p111 = scmp.eq.s32.totalorder %s21, 0
      %p112 = por %p110, %p111
      %p113 = scmp.le.s32.totalorder 1, %s15
      %p114 = scmp.lt.s32.totalorder %s15, 4
      %p115 = pnand %p113, %p114
      %p116 = pneg %p115
      // Predicated region
      $region9: #{tpu_custom_call.1} parent=5 // pred_check
        _
      $region10: #{tpu_custom_call.1} parent=5 // pred_check_branch
        %118 = sbr.rel (%p115) target = $region12
      $region11: #{tpu_custom_call.1} parent=5 // pred_region
        %s119 = ssub.s32 %s15, 1
      $region12: #{tpu_custom_call.1} parent=5 // pred_fallthru
        _
      %p120 = scmp.lt.s32.totalorder %s15, 3
      // Predicated region
      $region13: #{tpu_custom_call.1} parent=5 // pred_check
        %p121 = pneg %p120
      $region14: #{tpu_custom_call.1} parent=5 // pred_check_branch
        %123 = sbr.rel (%p121) target = $region16
      $region15: #{tpu_custom_call.1} parent=5 // pred_region
        // Predicated region
        $region17: #{tpu_custom_call.1} parent=15 // pred_check
          %p124 = pneg %p47
        $region18: #{tpu_custom_call.1} parent=15 // pred_check_branch
          %126 = sbr.rel (%p124) target = $region20
        $region19: #{tpu_custom_call.1} parent=15 // pred_region
          %s127 = sand.u32 %s37, 1
          %s128 = scalar_lea.sflag [#allocation4], %s127
          %s129 = sand.u32 %s37, 1
          %s130 = scalar_lea.vmem [#allocation3], %s129
          %s132 = ssub.s32 16, 16
          %133 = vsyncadd %s128, %s132
          %s134 = smul.addr %s23, 16
          %s135 = scalar_lea.hbm %s0, %s134
          %s137 = sshll.u32 %s130, 4
          %s138 = int_to_ptr.vmem [resolvable:$true] %s137
          %140 = dma.hbm_to_vmem [thread:$0]  %s135, 16, %s138, %s128
        $region20: #{tpu_custom_call.1} parent=15 // pred_fallthru
          _
        // Predicated region
        $region21: #{tpu_custom_call.1} parent=15 // pred_check
          %p141 = pneg %p73
        $region22: #{tpu_custom_call.1} parent=15 // pred_check_branch
          %143 = sbr.rel (%p141) target = $region24
        $region23: #{tpu_custom_call.1} parent=15 // pred_region
          %s144 = sand.u32 %s63, 1
          %s145 = scalar_lea.sflag [#allocation7], %s144
          %s146 = sand.u32 %s63, 1
          %s147 = scalar_lea.vmem [#allocation6], %s146
          %s149 = ssub.s32 16, 16
          %150 = vsyncadd %s145, %s149
          %s151 = smul.addr %s23, 16
          %s152 = scalar_lea.hbm %s1, %s151
          %s154 = sshll.u32 %s147, 4
          %s155 = int_to_ptr.vmem [resolvable:$true] %s154
          %157 = dma.hbm_to_vmem [thread:$0]  %s152, 16, %s155, %s145
        $region24: #{tpu_custom_call.1} parent=15 // pred_fallthru
          _
      $region16: #{tpu_custom_call.1} parent=5 // pred_fallthru
        _
      %p158 = scmp.le.s32.totalorder 1, %s15
      %p159 = scmp.lt.s32.totalorder %s15, 4
      %p160 = pnand %p158, %p159
      %p161 = pneg %p160
      // Predicated region
      $region25: #{tpu_custom_call.1} parent=5 // pred_check
        _
      $region26: #{tpu_custom_call.1} parent=5 // pred_check_branch
        %163 = sbr.rel (%p160) target = $region28
      $region27: #{tpu_custom_call.1} parent=5 // pred_region
        %s164 = ssub.s32 %s15, 1
        %s165 = sand.u32 %s40, 1
        %s166 = scalar_lea.sflag [#allocation4], %s165
        %s167 = sand.u32 %s40, 1
        %s168 = scalar_lea.vmem [#allocation3], %s167
        // Predicated region
        $region29: #{tpu_custom_call.1} parent=27 // pred_check
          %p169 = pneg %p53
        $region30: #{tpu_custom_call.1} parent=27 // pred_check_branch
          %171 = sbr.rel (%p169) target = $region32
        $region31: #{tpu_custom_call.1} parent=27 // pred_region
          %172 = dma.done %s166, 16
        $region32: #{tpu_custom_call.1} parent=27 // pred_fallthru
          _
        %s173 = sand.u32 %s66, 1
        %s174 = scalar_lea.sflag [#allocation7], %s173
        %s175 = sand.u32 %s66, 1
        %s176 = scalar_lea.vmem [#allocation6], %s175
        // Predicated region
        $region33: #{tpu_custom_call.1} parent=27 // pred_check
          %p177 = pneg %p79
        $region34: #{tpu_custom_call.1} parent=27 // pred_check_branch
          %179 = sbr.rel (%p177) target = $region36
        $region35: #{tpu_custom_call.1} parent=27 // pred_region
          %180 = dma.done %s174, 16
        $region36: #{tpu_custom_call.1} parent=27 // pred_fallthru
          _
        %s181 = sand.u32 %s40, 1
        %s182 = scalar_lea.sflag [#allocation4], %s181
        %s183 = sand.u32 %s40, 1
        %s184 = scalar_lea.vmem [#allocation3], %s183
        %p185 = pneg %p53
        %p186 = pneg %p50
        %s187 = sand.u32 %s66, 1
        %s188 = scalar_lea.sflag [#allocation7], %s187
        %s189 = sand.u32 %s66, 1
        %s190 = scalar_lea.vmem [#allocation6], %s189
        %p191 = pneg %p79
        %p192 = pneg %p76
        %p193 = pneg %p105
        %p194 = pneg %p102
        %p196 = scmp.eq.s32.totalorder %s25, 0
        // Predicated region
        $region37: #{tpu_custom_call.1} parent=27 // pred_check
          %p197 = pneg %p196
        $region38: #{tpu_custom_call.1} parent=27 // pred_check_branch
          %199 = sbr.rel (%p197) target = $region40
        $region39: #{tpu_custom_call.1} parent=27 // pred_region
          %200 = vst [vmem:[#allocation2] sm:$0xff] 0.0
          %201 = vst [vmem:[#allocation2 + $0x8] sm:$0xff] 0.0
        $region40: #{tpu_custom_call.1} parent=27 // pred_fallthru
          _
        %v202 = vld [vmem:[%s168] sm:$0x1]
        %v203 = vld [vmem:[%s176] sm:$0x1]
        %s204 = smul.u32 %s24, 8
        %v205 = vlaneseq
        %v206 = vshrl.u32 %v205, 7
        %v207 = vstv %s204
        %v208 = vadd.s32 %v206, %v207
        %v209 = vadd.s32 %v206, 8
        %v210 = vadd.s32 %v206, 16
        %v211 = vadd.s32 %v206, 24
        %v212 = vadd.s32 %v206, 32
        %v213 = vadd.s32 %v206, 40
        %v214 = vadd.s32 %v206, 48
        %v215 = vadd.s32 %v206, 56
        %v216 = vadd.s32 %v206, 64
        %v217 = vadd.s32 %v206, 72
        %v218 = vadd.s32 %v206, 80
        %v219 = vadd.s32 %v206, 88
        %v220 = vadd.s32 %v206, 96
        %v221 = vadd.s32 %v206, 104
        %v222 = vadd.s32 %v206, 112
        %v223 = vadd.s32 %v206, 120
        %v224 = vadd.s32 %v206, 128
        %v225 = vadd.s32 %v206, 136
        %v226 = vadd.s32 %v206, 144
        %v227 = vadd.s32 %v206, 152
        %v228 = vadd.s32 %v206, 160
        %v229 = vadd.s32 %v206, 168
        %v230 = vadd.s32 %v206, 176
        %v231 = vadd.s32 %v206, 184
        %v232 = vadd.s32 %v206, 192
        %v233 = vadd.s32 %v206, 200
        %v234 = vadd.s32 %v206, 208
        %v235 = vadd.s32 %v206, 216
        %v236 = vadd.s32 %v206, 224
        %v237 = vadd.s32 %v206, 232
        %v238 = vadd.s32 %v206, 240
        %v239 = vadd.s32 %v206, 248
        %v240 = vlaneseq
        %v241 = vshrl.u32 %v240, 7
        %v242 = vsub.s32 0, %v241
        %v243 = vrot.slane %v202, %v242
        %vm244 = vcmp.eq.s32.totalorder %v243, %v208
        %v245 = vsel %vm244, 1, 0
        %v246 = vcvt.s32.f32 %v245
        %v247 = vpack.c.bf16 %v246, %v246
        %v248 = vlaneseq
        %v249 = vshrl.u32 %v248, 7
        %v250 = vsub.s32 0, %v249
        %v251 = vrot.slane %v203, %v250
        %vm252 = vcmp.eq.s32.totalorder %v251, %v206
        %vm253 = vcmp.eq.s32.totalorder %v251, %v209
        %vm254 = vcmp.eq.s32.totalorder %v251, %v210
        %vm255 = vcmp.eq.s32.totalorder %v251, %v211
        %vm256 = vcmp.eq.s32.totalorder %v251, %v212
        %vm257 = vcmp.eq.s32.totalorder %v251, %v213
        %vm258 = vcmp.eq.s32.totalorder %v251, %v214
        %vm259 = vcmp.eq.s32.totalorder %v251, %v215
        %vm260 = vcmp.eq.s32.totalorder %v251, %v216
        %vm261 = vcmp.eq.s32.totalorder %v251, %v217
        %vm262 = vcmp.eq.s32.totalorder %v251, %v218
        %vm263 = vcmp.eq.s32.totalorder %v251, %v219
        %vm264 = vcmp.eq.s32.totalorder %v251, %v220
        %vm265 = vcmp.eq.s32.totalorder %v251, %v221
        %vm266 = vcmp.eq.s32.totalorder %v251, %v222
        %vm267 = vcmp.eq.s32.totalorder %v251, %v223
        %vm268 = vcmp.eq.s32.totalorder %v251, %v224
        %vm269 = vcmp.eq.s32.totalorder %v251, %v225
        %vm270 = vcmp.eq.s32.totalorder %v251, %v226
        %vm271 = vcmp.eq.s32.totalorder %v251, %v227
        %vm272 = vcmp.eq.s32.totalorder %v251, %v228
        %vm273 = vcmp.eq.s32.totalorder %v251, %v229
        %vm274 = vcmp.eq.s32.totalorder %v251, %v230
        %vm275 = vcmp.eq.s32.totalorder %v251, %v231
        %vm276 = vcmp.eq.s32.totalorder %v251, %v232
        %vm277 = vcmp.eq.s32.totalorder %v251, %v233
        %vm278 = vcmp.eq.s32.totalorder %v251, %v234
        %vm279 = vcmp.eq.s32.totalorder %v251, %v235
        %vm280 = vcmp.eq.s32.totalorder %v251, %v236
        %vm281 = vcmp.eq.s32.totalorder %v251, %v237
        %vm282 = vcmp.eq.s32.totalorder %v251, %v238
        %vm283 = vcmp.eq.s32.totalorder %v251, %v239
        %v284 = vsel %vm252, 1, 0
        %v285 = vsel %vm253, 1, 0
        %v286 = vsel %vm254, 1, 0
        %v287 = vsel %vm255, 1, 0
        %v288 = vsel %vm256, 1, 0
        %v289 = vsel %vm257, 1, 0
        %v290 = vsel %vm258, 1, 0
        %v291 = vsel %vm259, 1, 0
        %v292 = vsel %vm260, 1, 0
        %v293 = vsel %vm261, 1, 0
        %v294 = vsel %vm262, 1, 0
        %v295 = vsel %vm263, 1, 0
        %v296 = vsel %vm264, 1, 0
        %v297 = vsel %vm265, 1, 0
        %v298 = vsel %vm266, 1, 0
        %v299 = vsel %vm267, 1, 0
        %v300 = vsel %vm268, 1, 0
        %v301 = vsel %vm269, 1, 0
        %v302 = vsel %vm270, 1, 0
        %v303 = vsel %vm271, 1, 0
        %v304 = vsel %vm272, 1, 0
        %v305 = vsel %vm273, 1, 0
        %v306 = vsel %vm274, 1, 0
        %v307 = vsel %vm275, 1, 0
        %v308 = vsel %vm276, 1, 0
        %v309 = vsel %vm277, 1, 0
        %v310 = vsel %vm278, 1, 0
        %v311 = vsel %vm279, 1, 0
        %v312 = vsel %vm280, 1, 0
        %v313 = vsel %vm281, 1, 0
        %v314 = vsel %vm282, 1, 0
        %v315 = vsel %vm283, 1, 0
        %v316 = vcvt.s32.f32 %v284
        %v317 = vcvt.s32.f32 %v285
        %v318 = vcvt.s32.f32 %v286
        %v319 = vcvt.s32.f32 %v287
        %v320 = vcvt.s32.f32 %v288
        %v321 = vcvt.s32.f32 %v289
        %v322 = vcvt.s32.f32 %v290
        %v323 = vcvt.s32.f32 %v291
        %v324 = vcvt.s32.f32 %v292
        %v325 = vcvt.s32.f32 %v293
        %v326 = vcvt.s32.f32 %v294
        %v327 = vcvt.s32.f32 %v295
        %v328 = vcvt.s32.f32 %v296
        %v329 = vcvt.s32.f32 %v297
        %v330 = vcvt.s32.f32 %v298
        %v331 = vcvt.s32.f32 %v299
        %v332 = vcvt.s32.f32 %v300
        %v333 = vcvt.s32.f32 %v301
        %v334 = vcvt.s32.f32 %v302
        %v335 = vcvt.s32.f32 %v303
        %v336 = vcvt.s32.f32 %v304
        %v337 = vcvt.s32.f32 %v305
        %v338 = vcvt.s32.f32 %v306
        %v339 = vcvt.s32.f32 %v307
        %v340 = vcvt.s32.f32 %v308
        %v341 = vcvt.s32.f32 %v309
        %v342 = vcvt.s32.f32 %v310
        %v343 = vcvt.s32.f32 %v311
        %v344 = vcvt.s32.f32 %v312
        %v345 = vcvt.s32.f32 %v313
        %v346 = vcvt.s32.f32 %v314
        %v347 = vcvt.s32.f32 %v315
        %v348 = vpack.c.bf16 %v317, %v316
        %v349 = vpack.c.bf16 %v319, %v318
        %v350 = vpack.c.bf16 %v321, %v320
        %v351 = vpack.c.bf16 %v323, %v322
        %v352 = vpack.c.bf16 %v325, %v324
        %v353 = vpack.c.bf16 %v327, %v326
        %v354 = vpack.c.bf16 %v329, %v328
        %v355 = vpack.c.bf16 %v331, %v330
        %v356 = vpack.c.bf16 %v333, %v332
        %v357 = vpack.c.bf16 %v335, %v334
        %v358 = vpack.c.bf16 %v337, %v336
        %v359 = vpack.c.bf16 %v339, %v338
        %v360 = vpack.c.bf16 %v341, %v340
        %v361 = vpack.c.bf16 %v343, %v342
        %v362 = vpack.c.bf16 %v345, %v344
        %v363 = vpack.c.bf16 %v347, %v346
        %v364 = vld [vmem:[#allocation2] sm:$0xff]
        %v365 = vld [vmem:[#allocation2 + $0x8] sm:$0xff]
        %366 = vmatprep.subr.bf16.mxu0 0
        %367 = vmatpush1.bf16.xpose.msra.mxu0 %v355
        %368 = vmatprep.subr.bf16.mxu0 0
        %369 = vmatpush1.bf16.xpose.msra.mxu0 %v354
        %370 = vmatprep.subr.bf16.mxu0 0
        %371 = vmatpush1.bf16.xpose.msra.mxu0 %v353
        %372 = vmatprep.subr.bf16.mxu0 0
        %373 = vmatpush1.bf16.xpose.msra.mxu0 %v352
        %374 = vmatprep.subr.bf16.mxu0 0
        %375 = vmatpush1.bf16.xpose.msra.mxu0 %v351
        %376 = vmatprep.subr.bf16.mxu0 0
        %377 = vmatpush1.bf16.xpose.msra.mxu0 %v350
        %378 = vmatprep.subr.bf16.mxu0 0
        %379 = vmatpush1.bf16.xpose.msra.mxu0 %v349
        %380 = vmatprep.subr.bf16.mxu0 0
        %381 = vmatpush1.bf16.xpose.msra.mxu0 %v348
        %382 = vmatprep.subr.bf16.mxu0 0
        %383 = vmatpush2.bf16.xpose.msra.mxu0 %v363
        %384 = vmatprep.subr.bf16.mxu0 0
        %385 = vmatpush2.bf16.xpose.msra.mxu0 %v362
        %386 = vmatprep.subr.bf16.mxu0 0
        %387 = vmatpush2.bf16.xpose.msra.mxu0 %v361
        %388 = vmatprep.subr.bf16.mxu0 0
        %389 = vmatpush2.bf16.xpose.msra.mxu0 %v360
        %390 = vmatprep.subr.bf16.mxu0 0
        %391 = vmatpush2.bf16.xpose.msra.mxu0 %v359
        %392 = vmatprep.subr.bf16.mxu0 0
        %393 = vmatpush2.bf16.xpose.msra.mxu0 %v358
        %394 = vmatprep.subr.bf16.mxu0 0
        %395 = vmatpush2.bf16.xpose.msra.mxu0 %v357
        %396 = vmatprep.subr.bf16.mxu0 0
        %397 = vmatpush2.bf16.xpose.msra.mxu0 %v356
        %398 = vmatprep.mubr.bf16.mxu0 0
        %399 = vmatmul.mubr.bf16.gmra.mxu0 %v247
        %v400 = vpop.f32.mrf.mxu0
        %v401 = vadd.f32 0.0, %v400
        %v402 = vpop.f32.mrf.mxu0
        %v403 = vadd.f32 0.0, %v402
        %v404 = vpop.f32.mrf.mxu0
        %v405 = vpop.f32.mrf.mxu0
        %406 = vdwg.mxu0
        %v407 = vadd.f32 %v364, %v401
        %v408 = vadd.f32 %v365, %v403
        %409 = vst [vmem:[#allocation2] sm:$0xff] %v407
        %410 = vst [vmem:[#allocation2 + $0x8] sm:$0xff] %v408
        %p411 = scmp.eq.s32.totalorder %s25, 2
        // Predicated region
        $region41: #{tpu_custom_call.1} parent=27 // pred_check
          %p412 = pneg %p411
        $region42: #{tpu_custom_call.1} parent=27 // pred_check_branch
          %414 = sbr.rel (%p412) target = $region44
        $region43: #{tpu_custom_call.1} parent=27 // pred_region
          %v415 = vld [vmem:[#allocation2] sm:$0xff]
          %v416 = vld [vmem:[#allocation2 + $0x8] sm:$0xff]
          %v417 = vcvt.f32.s32.to.zero.pseudo %v415
          %v418 = vcvt.f32.s32.to.zero.pseudo %v416
          %v419 = vlaneseq
          %v420 = vand.u32 %v419, 127
          %v421 = vadd.s32 %v420, 128
          %v422 = vsub.s32 255, %v420
          %v423 = vsub.s32 255, %v421
          %v424 = vmul.u32 %v417, 256
          %v425 = vmul.u32 %v418, 256
          %v426 = vadd.s32 %v424, %v422
          %v427 = vadd.s32 %v425, %v423
          %vm428 = vcmp.gt.s32.totalorder %v426, %v427
          %v429 = vsel %vm428, %v426, %v427
          %v430 = vand.u32 %v429, 65535
          %v431 = vshra.s32 %v429, 16
          %v432 = vcvt.s32.f32 %v430
          %v433 = vcvt.s32.f32 %v431
          %434 = vmax.xlane.f32.xlu0 %v433
          %v435 = vpop.xlane.xlu0 %434
          %vm436 = vcmp.eq.f32.partialorder %v433, %v435
          %v437 = vsel %vm436, %v432, -inf
          %438 = vmax.xlane.f32.xlu0 %v437
          %v439 = vpop.xlane.xlu0 %438
          %v440 = vcvt.f32.s32 %v439
          %v441 = vcvt.f32.s32 %v435
          %v442 = vshll.u32 %v441, 16
          %v443 = vadd.s32 %v442, %v440
          %vm444 = vcmp.eq.s32.totalorder %v426, %v443
          %vm445 = vcmp.eq.s32.totalorder %v427, %v443
          %vm446 = vcmp.ge.s32.totalorder %v417, 2
          %vm447 = vcmp.ge.s32.totalorder %v418, 2
          %vm448 = vmand %vm444, %vm446
          %vm449 = vmand %vm445, %vm447
          %v450 = vsel %vm448, 1, 4294967295
          %v451 = vsel %vm449, 1, 4294967295
          %v452 = vpack.c.b16 %v451, %v450
          %v453 = vpack.c.b8 %v452, %v452
          %454 = vst [vmem:[#allocation8] sm:$0xf] %v453
          %v455 = vsel %vm444, 0, %v417
          %v456 = vsel %vm445, 0, %v418
          %v457 = vmul.u32 %v455, 256
          %v458 = vmul.u32 %v456, 256
          %v459 = vadd.s32 %v457, %v422
          %v460 = vadd.s32 %v458, %v423
          %vm461 = vcmp.gt.s32.totalorder %v459, %v460
          %v462 = vsel %vm461, %v459, %v460
          %v463 = vand.u32 %v462, 65535
          %v464 = vshra.s32 %v462, 16
          %v465 = vcvt.s32.f32 %v463
          %v466 = vcvt.s32.f32 %v464
          %467 = vmax.xlane.f32.xlu0 %v466
          %v468 = vpop.xlane.xlu0 %467
          %vm469 = vcmp.eq.f32.partialorder %v466, %v468
          %v470 = vsel %vm469, %v465, -inf
          %471 = vmax.xlane.f32.xlu0 %v470
          %v472 = vpop.xlane.xlu0 %471
          %v473 = vcvt.f32.s32 %v472
          %v474 = vcvt.f32.s32 %v468
          %v475 = vshll.u32 %v474, 16
          %v476 = vadd.s32 %v475, %v473
          %vm477 = vcmp.eq.s32.totalorder %v459, %v476
          %vm478 = vcmp.eq.s32.totalorder %v460, %v476
          %vm479 = vcmp.ge.s32.totalorder %v455, 2
          %vm480 = vcmp.ge.s32.totalorder %v456, 2
          %vm481 = vmand %vm477, %vm479
          %vm482 = vmand %vm478, %vm480
          %v483 = vsel %vm481, 1, 4294967295
          %v484 = vsel %vm482, 1, 4294967295
          %v485 = vpack.c.b16 %v484, %v483
          %v486 = vpack.c.b8 %v485, %v485
          %s487 = scalar_lea.vmem [#allocation8], 4
          %488 = vst [vmem:[%s487] sm:$0xf] %v486
          %v489 = vsel %vm477, 0, %v455
          %v490 = vsel %vm478, 0, %v456
          %v491 = vmul.u32 %v489, 256
          %v492 = vmul.u32 %v490, 256
          %v493 = vadd.s32 %v491, %v422
          %v494 = vadd.s32 %v492, %v423
          %vm495 = vcmp.gt.s32.totalorder %v493, %v494
          %v496 = vsel %vm495, %v493, %v494
          %v497 = vand.u32 %v496, 65535
          %v498 = vshra.s32 %v496, 16
          %v499 = vcvt.s32.f32 %v497
          %v500 = vcvt.s32.f32 %v498
          %501 = vmax.xlane.f32.xlu0 %v500
          %v502 = vpop.xlane.xlu0 %501
          %vm503 = vcmp.eq.f32.partialorder %v500, %v502
          %v504 = vsel %vm503, %v499, -inf
          %505 = vmax.xlane.f32.xlu0 %v504
          %v506 = vpop.xlane.xlu0 %505
          %v507 = vcvt.f32.s32 %v506
          %v508 = vcvt.f32.s32 %v502
          %v509 = vshll.u32 %v508, 16
          %v510 = vadd.s32 %v509, %v507
          %vm511 = vcmp.eq.s32.totalorder %v493, %v510
          %vm512 = vcmp.eq.s32.totalorder %v494, %v510
          %vm513 = vcmp.ge.s32.totalorder %v489, 2
          %vm514 = vcmp.ge.s32.totalorder %v490, 2
          %vm515 = vmand %vm511, %vm513
          %vm516 = vmand %vm512, %vm514
          %v517 = vsel %vm515, 1, 4294967295
          %v518 = vsel %vm516, 1, 4294967295
          %v519 = vpack.c.b16 %v518, %v517
          %v520 = vpack.c.b8 %v519, %v519
          %s521 = scalar_lea.vmem [#allocation8], 8
          %522 = vst [vmem:[%s521] sm:$0xf] %v520
          %v523 = vsel %vm511, 0, %v489
          %v524 = vsel %vm512, 0, %v490
          %v525 = vmul.u32 %v523, 256
          %v526 = vmul.u32 %v524, 256
          %v527 = vadd.s32 %v525, %v422
          %v528 = vadd.s32 %v526, %v423
          %vm529 = vcmp.gt.s32.totalorder %v527, %v528
          %v530 = vsel %vm529, %v527, %v528
          %v531 = vand.u32 %v530, 65535
          %v532 = vshra.s32 %v530, 16
          %v533 = vcvt.s32.f32 %v531
          %v534 = vcvt.s32.f32 %v532
          %535 = vmax.xlane.f32.xlu0 %v534
          %v536 = vpop.xlane.xlu0 %535
          %vm537 = vcmp.eq.f32.partialorder %v534, %v536
          %v538 = vsel %vm537, %v533, -inf
          %539 = vmax.xlane.f32.xlu0 %v538
          %v540 = vpop.xlane.xlu0 %539
          %v541 = vcvt.f32.s32 %v540
          %v542 = vcvt.f32.s32 %v536
          %v543 = vshll.u32 %v542, 16
          %v544 = vadd.s32 %v543, %v541
          %vm545 = vcmp.eq.s32.totalorder %v527, %v544
          %vm546 = vcmp.eq.s32.totalorder %v528, %v544
          %vm547 = vcmp.ge.s32.totalorder %v523, 2
          %vm548 = vcmp.ge.s32.totalorder %v524, 2
          %vm549 = vmand %vm545, %vm547
          %vm550 = vmand %vm546, %vm548
          %v551 = vsel %vm549, 1, 4294967295
          %v552 = vsel %vm550, 1, 4294967295
          %v553 = vpack.c.b16 %v552, %v551
          %v554 = vpack.c.b8 %v553, %v553
          %s555 = scalar_lea.vmem [#allocation8], 12
          %556 = vst [vmem:[%s555] sm:$0xf] %v554
          %v557 = vsel %vm545, 0, %v523
          %v558 = vsel %vm546, 0, %v524
          %v559 = vmul.u32 %v557, 256
          %v560 = vmul.u32 %v558, 256
          %v561 = vadd.s32 %v559, %v422
          %v562 = vadd.s32 %v560, %v423
          %vm563 = vcmp.gt.s32.totalorder %v561, %v562
          %v564 = vsel %vm563, %v561, %v562
          %v565 = vand.u32 %v564, 65535
          %v566 = vshra.s32 %v564, 16
          %v567 = vcvt.s32.f32 %v565
          %v568 = vcvt.s32.f32 %v566
          %569 = vmax.xlane.f32.xlu0 %v568
          %v570 = vpop.xlane.xlu0 %569
          %vm571 = vcmp.eq.f32.partialorder %v568, %v570
          %v572 = vsel %vm571, %v567, -inf
          %573 = vmax.xlane.f32.xlu0 %v572
          %v574 = vpop.xlane.xlu0 %573
          %v575 = vcvt.f32.s32 %v574
          %v576 = vcvt.f32.s32 %v570
          %v577 = vshll.u32 %v576, 16
          %v578 = vadd.s32 %v577, %v575
          %vm579 = vcmp.eq.s32.totalorder %v561, %v578
          %vm580 = vcmp.eq.s32.totalorder %v562, %v578
          %vm581 = vcmp.ge.s32.totalorder %v557, 2
          %vm582 = vcmp.ge.s32.totalorder %v558, 2
          %vm583 = vmand %vm579, %vm581
          %vm584 = vmand %vm580, %vm582
          %v585 = vsel %vm583, 1, 4294967295
          %v586 = vsel %vm584, 1, 4294967295
          %v587 = vpack.c.b16 %v586, %v585
          %v588 = vpack.c.b8 %v587, %v587
          %s589 = scalar_lea.vmem [#allocation8], 16
          %590 = vst [vmem:[%s589] sm:$0xf] %v588
        $region44: #{tpu_custom_call.1} parent=27 // pred_fallthru
          _
        // Predicated region
        $region45: #{tpu_custom_call.1} parent=27 // pred_check
          %p591 = pneg %p102
        $region46: #{tpu_custom_call.1} parent=27 // pred_check_branch
          %593 = sbr.rel (%p591) target = $region48
        $region47: #{tpu_custom_call.1} parent=27 // pred_region
          %s595 = ssub.s32 320, 320
          %596 = vsyncadd [#allocation5], %s595
          %s597 = smul.addr %s24, 2
          %s598 = smul.addr %s597, 32
          %s599 = scalar_lea.hbm %s2, %s598
          %s600 = sshll.u32 [#allocation8], 4
          %s601 = int_to_ptr.vmem [resolvable:$true] %s600
          %606 = dma.vmem_to_hbm [thread:$0]  %s601, 320, %s599, [#allocation5], 64, 64, 4
        $region48: #{tpu_custom_call.1} parent=27 // pred_fallthru
          _
        // Predicated region
        $region49: #{tpu_custom_call.1} parent=27 // pred_check
          %p607 = pneg %p102
        $region50: #{tpu_custom_call.1} parent=27 // pred_check_branch
          %609 = sbr.rel (%p607) target = $region52
        $region51: #{tpu_custom_call.1} parent=27 // pred_region
          %610 = dma.done [#allocation5], 320
        $region52: #{tpu_custom_call.1} parent=27 // pred_fallthru
          _
      $region28: #{tpu_custom_call.1} parent=5 // pred_fallthru
        _
      %p611 = scmp.le.s32.totalorder 2, %s15
      // Predicated region
      $region53: #{tpu_custom_call.1} parent=5 // pred_check
        %p612 = pneg %p611
      $region54: #{tpu_custom_call.1} parent=5 // pred_check_branch
        %614 = sbr.rel (%p612) target = $region56
      $region55: #{tpu_custom_call.1} parent=5 // pred_region
        %s615 = ssub.s32 %s15, 2
      $region56: #{tpu_custom_call.1} parent=5 // pred_fallthru
        _
    $region6: #{tpu_custom_call.1} parent=1 // loop_footer
      %s19 = sadd.s32 1, %s15
    $region7: #{tpu_custom_call.1} parent=1 // loop_footer_branch
      %14 = sbr.rel target = $region3
    $region8: #{tpu_custom_call.1} parent=1 // loop_exit
      _
    %616 = vsyncpa [#allocation4], 1
    %s617 = scalar_lea.sflag [#allocation4], 1
    %618 = vsyncpa %s617, 1
    %619 = vsyncpa [#allocation7], 1
    %s620 = scalar_lea.sflag [#allocation7], 1
    %621 = vsyncpa %s620, 1
    %622 = vsyncpa [#allocation5], 1
    %s623 = scalar_lea.sflag [#allocation5], 1
    %624 = vsyncpa %s623, 1

</llo_original>
